<compile_context>
chip_gen: v5e
topology: v5e:2x2
jax: 0.10.0
libtpu: 0.0.40
codegen_flags: <defaults>
</compile_context>

<pallas_src>
import functools
import math

import jax
import jax.numpy as jnp
import numpy as np
from jax.experimental import pallas as pl
from jax.experimental.pallas import tpu as pltpu


LANE = 128                   # TPU lane width: keep last dims lane-dense
DEFAULT_BLOCK_ROWS = 512     # rows (samples / nodes) per grid step
_MIB = 1024 * 1024


def _round_up(x, m):
    return (x + m - 1) // m * m


def mlp2_kernel(x_ref, w1_ref, b1_ref, w2_ref, b2_ref, o_ref):
    """Fused MLP forward for one (bm, Fp) row tile.

    x_ref : VMEM (bm, Fp) bf16  -- input feature row tile (streamed)
    w1_ref: VMEM (Fp, Hp) bf16  -- Linear1 weight, pre-transposed (resident)
    b1_ref: VMEM (1,  Hp) f32   -- Linear1 bias
    w2_ref: VMEM (Hp, Cp) bf16  -- Linear2 weight, pre-transposed + padded (resident)
    b2_ref: VMEM (1,  Cp) f32   -- Linear2 bias (zero-padded)
    o_ref : VMEM (bm, Cp)       -- output logits tile (padded class dim)
    """
    # Layer 1: MXU matmul, f32 accumulation; bias + ReLU ride in VPU slots.
    h = jnp.dot(x_ref[...], w1_ref[...], preferred_element_type=jnp.float32)
    h = jnp.maximum(h + b1_ref[...], 0.0)
    # Layer 2: hidden cast back to bf16 for the MXU, accumulate in f32.
    out = jnp.dot(h.astype(w2_ref.dtype), w2_ref[...],
                  preferred_element_type=jnp.float32)
    o_ref[...] = (out + b2_ref[...]).astype(o_ref.dtype)


def prepare_mlp_params(w1, b1, w2, b2, *, mxu_dtype=jnp.bfloat16):
    """One-time weight re-layout: transpose, pad to lane multiples, cast.

    Call at model init (NOT per forward call) so the per-call path does no
    weight transpose/pad/cast HBM traffic.
    """
    H, F = w1.shape
    C, H2 = w2.shape
    assert H2 == H and b1.shape == (H,) and b2.shape == (C,)
    Fp = _round_up(F, LANE)
    Hp = _round_up(H, LANE)
    Cp = _round_up(C, LANE)   # lane-dense output => unmasked full-lane stores
    w1t = jnp.zeros((Fp, Hp), mxu_dtype).at[:F, :H].set(w1.T.astype(mxu_dtype))
    b1p = jnp.zeros((1, Hp), jnp.float32).at[0, :H].set(b1.astype(jnp.float32))
    w2t = jnp.zeros((Hp, Cp), mxu_dtype).at[:H, :C].set(w2.T.astype(mxu_dtype))
    b2p = jnp.zeros((1, Cp), jnp.float32).at[0, :C].set(b2.astype(jnp.float32))
    return w1t, b1p, w2t, b2p


def mlp_forward_pallas(x, w1t, b1p, w2t, b2p, *,
                       n_class=None,
                       block_rows=DEFAULT_BLOCK_ROWS,
                       out_dtype=jnp.bfloat16,
                       return_padded=False):
    """out = relu(x @ w1.T + b1) @ w2.T + b2  (PyTorch nn.Linear convention).

    x               : (N, F). Pre-cast to bf16 by the caller to avoid a
                      per-call cast pass (other dtypes are re-cast here).
    w1t,b1p,w2t,b2p : outputs of prepare_mlp_params (already padded/cast).
    return_padded   : if True, return the padded (Np, Cp) buffer and let the
                      consumer fuse the [:N, :n_class] slice.
    """
    assert block_rows % 8 == 0
    N, F = x.shape
    Fp, Hp = w1t.shape
    Hp2, Cp = w2t.shape
    assert Hp2 == Hp and F <= Fp

    mxu_dtype = w1t.dtype
    if x.dtype != mxu_dtype:
        # Prefer pre-casting at the caller; this adds a full read+write of x.
        x = x.astype(mxu_dtype)

    # Row tiling: clamp the tile to the (padded) row count for small inputs.
    if N <= block_rows:
        bm = _round_up(max(N, 8), 8)
    else:
        bm = block_rows
    Np = _round_up(N, bm)

    # Pad x only when it is not already tile-aligned (aligned fast path = no copy).
    if (Np, Fp) != (N, F):
        x_p = jnp.zeros((Np, Fp), mxu_dtype).at[:N, :F].set(x)
    else:
        x_p = x

    in_isize = np.dtype(mxu_dtype).itemsize
    out_isize = np.dtype(out_dtype).itemsize

    # --- VMEM accounting for this tile plan: resident weights single-buffered,
    #     streamed x/out tiles double-buffered, f32 hidden temp. ---
    resident = (w1t.size + w2t.size) * in_isize + (b1p.size + b2p.size) * 4
    streamed = 2 * bm * Fp * in_isize + 2 * bm * Cp * out_isize
    hidden = bm * Hp * 4
    vmem_need = resident + streamed + hidden
    vmem_limit = int(min(max(2 * vmem_need + 4 * _MIB, 16 * _MIB), 48 * _MIB))
    # Conservative guard against the smallest per-TC VMEM (v7x: 64 MiB); see
    # the K-tiled-fallback TODO at the top of the file.
    assert vmem_need <= 40 * _MIB, "tile plan exceeds per-TC VMEM budget"

    grid = (Np // bm,)   # keep >= 2 steps so the "parallel" axis feeds both v7x TCs

    cost = pl.CostEstimate(
        flops=2 * Np * Fp * Hp + 2 * Np * Hp * Cp,
        transcendentals=0,
        bytes_accessed=(x_p.size * in_isize
                        + (w1t.size + w2t.size) * in_isize
                        + (b1p.size + b2p.size) * 4
                        + Np * Cp * out_isize),
    )

    def resident_spec(shape):
        # Constant index_map -> block never changes; single buffer saves VMEM.
        return pl.BlockSpec(shape, lambda i: (0, 0), pipeline_mode=pl.Buffered(1))

    out_p = pl.pallas_call(
        mlp2_kernel,
        out_shape=jax.ShapeDtypeStruct((Np, Cp), out_dtype),
        grid=grid,
        in_specs=[
            pl.BlockSpec((bm, Fp), lambda i: (i, 0)),   # streamed x row tile
            resident_spec((Fp, Hp)),                    # resident W1^T
            resident_spec((1, Hp)),                     # resident b1
            resident_spec((Hp, Cp)),                    # resident W2^T
            resident_spec((1, Cp)),                     # resident b2
        ],
        out_specs=pl.BlockSpec((bm, Cp), lambda i: (i, 0)),
        compiler_params=pltpu.CompilerParams(
            dimension_semantics=("parallel",),          # shard row tiles over TCs
            vmem_limit_bytes=vmem_limit,
        ),
        cost_estimate=cost,
    )(x_p, w1t, b1p, w2t, b2p)

    if return_padded:
        return out_p
    if n_class is None:
        raise ValueError("n_class is required when return_padded=False")
    return out_p[:N, :n_class]


def mlp_reference(x, w1, b1, w2, b2):
    h = jnp.maximum(x @ w1.T + b1, 0.0)
    return h @ w2.T + b2


if __name__ == "__main__":
    # Small shapes consistent with the module: N nodes, n_feat -> n_hid -> nclass.
    # N chosen so the 512-row tiles yield a >=2-step "parallel" grid.
    N, F, H, C = 1024, 128, 128, 8

    key = jax.random.PRNGKey(0)
    kx, kw1, kb1, kw2, kb2 = jax.random.split(key, 5)

    x = jax.random.normal(kx, (N, F), dtype=jnp.float32)
    bound1 = 1.0 / math.sqrt(F)
    w1 = jax.random.uniform(kw1, (H, F), minval=-bound1, maxval=bound1,
                            dtype=jnp.float32)
    b1 = jax.random.uniform(kb1, (H,), minval=-bound1, maxval=bound1,
                            dtype=jnp.float32)
    bound2 = 1.0 / math.sqrt(H)
    w2 = jax.random.uniform(kw2, (C, H), minval=-bound2, maxval=bound2,
                            dtype=jnp.float32)
    b2 = jax.random.uniform(kb2, (C,), minval=-bound2, maxval=bound2,
                            dtype=jnp.float32)

    # One-time weight re-layout (model init), hoisted out of the per-call path.
    params = prepare_mlp_params(w1, b1, w2, b2)
    params = jax.block_until_ready(params)

    # Pre-cast activations once; N % 512 == 0 and F % 128 == 0, so the per-call
    # wrapper performs no pad/copy and the kernel streams x directly.
    x_bf16 = x.astype(jnp.bfloat16)

    fwd = jax.jit(functools.partial(mlp_forward_pallas,
                                    block_rows=DEFAULT_BLOCK_ROWS,
                                    out_dtype=jnp.bfloat16,
                                    return_padded=True))
    out_padded = jax.block_until_ready(fwd(x_bf16, *params))

    # Consumer-side unpad (kept out of the kernel's per-call hot path).
    out = out_padded[:N, :C].astype(jnp.float32)

    ref = mlp_reference(x, w1, b1, w2, b2)
    assert out.shape == (N, C)
    # bf16 MXU inputs + bf16 output (f32 accumulation) -> loose tolerance.
    assert jnp.allclose(out, ref, atol=5e-2, rtol=5e-2), "Pallas output mismatch"

    print("KERNEL_OK")
</pallas_src>

<mosaic_0001>
module attributes {stable_mosaic.version = 11 : i64} {
  func.func @mlp2_kernel(%arg0: i32, %arg1: memref<512x128xbf16, #tpu.memory_space<vmem>>, %arg2: memref<128x128xbf16, #tpu.memory_space<vmem>>, %arg3: memref<1x128xf32, #tpu.memory_space<vmem>>, %arg4: memref<128x128xbf16, #tpu.memory_space<vmem>>, %arg5: memref<1x128xf32, #tpu.memory_space<vmem>>, %arg6: memref<512x128xbf16, #tpu.memory_space<vmem>>) attributes {dimension_semantics = [#tpu.dimension_semantics<parallel>], iteration_bounds = array<i64: 2>, scalar_prefetch = 0 : i64, scratch_operands = 0 : i64, tpu.core_type = #tpu.core_type<tc>, window_params = [{transform_indices = @transform_0, window_bounds = array<i64: 512, 128>}, {pipeline_mode = #tpu.pipeline_mode<synchronous>, transform_indices = @transform_1, window_bounds = array<i64: 128, 128>}, {pipeline_mode = #tpu.pipeline_mode<synchronous>, transform_indices = @transform_2, window_bounds = array<i64: 1, 128>}, {pipeline_mode = #tpu.pipeline_mode<synchronous>, transform_indices = @transform_3, window_bounds = array<i64: 128, 128>}, {pipeline_mode = #tpu.pipeline_mode<synchronous>, transform_indices = @transform_4, window_bounds = array<i64: 1, 128>}, {transform_indices = @transform_5, window_bounds = array<i64: 512, 128>}]} {
    %c0 = arith.constant 0 : index
    %c0_0 = arith.constant 0 : index
    %0 = vector.load %arg1[%c0, %c0_0] : memref<512x128xbf16, #tpu.memory_space<vmem>>, vector<512x128xbf16>
    %c0_1 = arith.constant 0 : index
    %c0_2 = arith.constant 0 : index
    %1 = vector.load %arg2[%c0_1, %c0_2] : memref<128x128xbf16, #tpu.memory_space<vmem>>, vector<128x128xbf16>
    %cst = arith.constant dense<0.000000e+00> : vector<512x128xf32>
    %2 = tpu.matmul %0, %1, %cst {dimension_numbers = #tpu.dot_dimension_numbers<[1], [0], [0], [1], [0, 0, 1, 1], [], []>} : vector<512x128xbf16>, vector<128x128xbf16>, vector<512x128xf32> -> vector<512x128xf32>
    %c0_3 = arith.constant 0 : index
    %c0_4 = arith.constant 0 : index
    %3 = vector.load %arg3[%c0_3, %c0_4] : memref<1x128xf32, #tpu.memory_space<vmem>>, vector<1x128xf32>
    %4 = vector.broadcast %3 : vector<1x128xf32> to vector<512x128xf32>
    %5 = arith.addf %2, %4 : vector<512x128xf32>
    %cst_5 = arith.constant 0.000000e+00 : f32
    %6 = vector.broadcast %cst_5 : f32 to vector<512x128xf32>
    %7 = arith.maximumf %5, %6 : vector<512x128xf32>
    %8 = arith.truncf %7 : vector<512x128xf32> to vector<512x128xbf16>
    %c0_6 = arith.constant 0 : index
    %c0_7 = arith.constant 0 : index
    %9 = vector.load %arg4[%c0_6, %c0_7] : memref<128x128xbf16, #tpu.memory_space<vmem>>, vector<128x128xbf16>
    %cst_8 = arith.constant dense<0.000000e+00> : vector<512x128xf32>
    %10 = tpu.matmul %8, %9, %cst_8 {dimension_numbers = #tpu.dot_dimension_numbers<[1], [0], [0], [1], [0, 0, 1, 1], [], []>} : vector<512x128xbf16>, vector<128x128xbf16>, vector<512x128xf32> -> vector<512x128xf32>
    %c0_9 = arith.constant 0 : index
    %c0_10 = arith.constant 0 : index
    %11 = vector.load %arg5[%c0_9, %c0_10] : memref<1x128xf32, #tpu.memory_space<vmem>>, vector<1x128xf32>
    %12 = vector.broadcast %11 : vector<1x128xf32> to vector<512x128xf32>
    %13 = arith.addf %10, %12 : vector<512x128xf32>
    %14 = arith.truncf %13 : vector<512x128xf32> to vector<512x128xbf16>
    %c0_11 = arith.constant 0 : index
    %c0_12 = arith.constant 0 : index
    %15 = vector.load %arg6[%c0_11, %c0_12] : memref<512x128xbf16, #tpu.memory_space<vmem>>, vector<512x128xbf16>
    tpu.vector_store %arg6[%c0_11, %c0_12], %14 {strides = array<i32>} : memref<512x128xbf16, #tpu.memory_space<vmem>>, vector<512x128xbf16>,
    return
  }
  func.func @transform_0(%arg0: i32) -> (i32, i32) {
    %c0_i32 = arith.constant 0 : i32
    %c0_i32_0 = arith.constant 0 : i32
    return %arg0, %c0_i32 : i32, i32
  }
  func.func @transform_1(%arg0: i32) -> (i32, i32) {
    %c0_i32 = arith.constant 0 : i32
    %c0_i32_0 = arith.constant 0 : i32
    %c0_i32_1 = arith.constant 0 : i32
    return %c0_i32, %c0_i32_0 : i32, i32
  }
  func.func @transform_2(%arg0: i32) -> (i32, i32) {
    %c0_i32 = arith.constant 0 : i32
    %c0_i32_0 = arith.constant 0 : i32
    %c0_i32_1 = arith.constant 0 : i32
    return %c0_i32, %c0_i32_0 : i32, i32
  }
  func.func @transform_3(%arg0: i32) -> (i32, i32) {
    %c0_i32 = arith.constant 0 : i32
    %c0_i32_0 = arith.constant 0 : i32
    %c0_i32_1 = arith.constant 0 : i32
    return %c0_i32, %c0_i32_0 : i32, i32
  }
  func.func @transform_4(%arg0: i32) -> (i32, i32) {
    %c0_i32 = arith.constant 0 : i32
    %c0_i32_0 = arith.constant 0 : i32
    %c0_i32_1 = arith.constant 0 : i32
    return %c0_i32, %c0_i32_0 : i32, i32
  }
  func.func @transform_5(%arg0: i32) -> (i32, i32) {
    %c0_i32 = arith.constant 0 : i32
    %c0_i32_0 = arith.constant 0 : i32
    return %arg0, %c0_i32 : i32, i32
  }
}

</mosaic_0001>

<llo_original>
// kernel: mlp_forward_pallas.1
$region0: #{mlp_forward_pallas.1}
  #allocation0 [shape = 'u32[]', space=smem, size = 0x4, offset = 0x4, fixed_abs, tag = 'smem constant byte address 0x4 - core index']
  #allocation1 [shape = 'u32[72,128]{1,0:T(1,128)}', space=vmem, size = 0x9000, scoped, tag = 'internal scratch']
  %s0 = inlined_call_operand.hbm [shape: bf16[1024,128], index: 0, kind: input, shape index: {}]
  %s1 = inlined_call_operand.hbm [shape: bf16[128,128], index: 1, kind: input, shape index: {}]
  %s2 = inlined_call_operand.vmem [shape: f32[1,128], index: 2, kind: input, shape index: {}]
  %s3 = inlined_call_operand.hbm [shape: bf16[128,128], index: 3, kind: input, shape index: {}]
  %s4 = inlined_call_operand.vmem [shape: f32[1,128], index: 4, kind: input, shape index: {}]
  %s5 = inlined_call_operand.hbm [shape: bf16[1024,128], index: 5, kind: output, shape index: {}]
  %s6 = sld [smem:[#allocation0]]
  $region65: #{mlp_forward_pallas.1} parent=0
    _
  %s8 = ssub.s32 1, %s6
  %s9 = scalar_select 0, %s8, %s6
  $region1: #{mlp_forward_pallas.1} parent=0
    #allocation2 [shape = 'u8[262144]{0}', space=vmem, size = 0x40000, scoped, tag = 'input window, operand 0']
    #allocation3 [shape = 's32[2]{0}', space=sflag, size = 0x8, scoped, tag = 'scoped memory for mlp_forward_pallas.1']
    #allocation4 [shape = 's32[2]{0}', space=sflag, size = 0x8, scoped, tag = 'scoped memory for mlp_forward_pallas.1']
    #allocation5 [shape = 'u8[32768]{0}', space=vmem, size = 0x8000, scoped, tag = 'input window, operand 1, single buffered']
    #allocation6 [shape = 's32[1]{0}', space=sflag, size = 0x4, scoped, tag = 'scoped memory for mlp_forward_pallas.1']
    #allocation7 [shape = 'u8[32768]{0}', space=vmem, size = 0x8000, scoped, tag = 'input window, operand 3, single buffered']
    #allocation8 [shape = 'u8[262144]{0}', space=vmem, size = 0x40000, scoped, tag = 'output window, operand 0']
    %10 = vsyncpa [#allocation3], 0
    %s11 = scalar_lea.sflag [#allocation3], 1
    %12 = vsyncpa %s11, 0
    %13 = vsyncpa [#allocation6], 0
    %14 = vsyncpa [#allocation4], 0
    %s15 = scalar_lea.sflag [#allocation4], 1
    %16 = vsyncpa %s15, 0
    loop: start=0, step=1, limit=4
    $region2: #{mlp_forward_pallas.1} parent=1 // loop_pre_header
      _
    $region3: #{mlp_forward_pallas.1} parent=1 // loop_header
      %s18 = sphi 0, %s22
      %p19 = scmp.ge.s32.totalorder %s18, 4
      %s28 = sphi 0, %s30
      %s31 = sphi 0, %s28
      %s32 = sphi 0, %s31
      %s48 = sphi 0, %s32
      %s52 = sphi 0, %s52
      %s54 = sphi 0, %s52
      %s55 = sphi 0, %s54
      %s69 = sphi 0, %s55
      %s73 = sphi 0, %s73
      %s75 = sphi 0, %s73
      %s76 = sphi 0, %s75
      %s90 = sphi 0, %s76
      %s94 = sphi 0, %s94
      %s96 = sphi 0, %s94
      %s97 = sphi 0, %s96
      %s111 = sphi 0, %s97
      %s115 = sphi 0, %s115
      %s117 = sphi 0, %s115
      %s118 = sphi 0, %s117
      %s132 = sphi 0, %s118
      %s138 = sphi 0, %s140
      %s141 = sphi 0, %s138
      %s142 = sphi 0, %s141
      %s158 = sphi 0, %s142
    $region4: #{mlp_forward_pallas.1} parent=1 // loop_header_branch
      %21 = sbr.rel (%p19) target = $region8
    $region5: #{mlp_forward_pallas.1} parent=1 // loop_body
      %s23 = ssub.s32 %s18, 1
      %s24 = ssub.s32 %s18, 2
      %s25 = sadd.s32 %s18, 1
      %s26 = ssub.s32 %s18, %s25
      %p27 = scmp.eq.s32.totalorder %s26, 0
      %s29 = sadd.s32 %s28, 1
      %s30 = scalar_select %p27, %s28, %s29
      %p33 = pneg %p27
      %p34 = scmp.eq.s32.totalorder %s18, 1
      %p35 = por %p33, %p34
      %p36 = scmp.ne.s32.totalorder %s28, %s31
      %p37 = scmp.eq.s32.totalorder %s18, 0
      %p38 = por %p36, %p37
      %p39 = scmp.ne.s32.totalorder %s28, %s31
      %p40 = scmp.eq.s32.totalorder %s23, 1
      %p41 = por %p39, %p40
      %p42 = scmp.ne.s32.totalorder %s31, %s32
      %p43 = scmp.eq.s32.totalorder %s23, 0
      %p44 = por %p42, %p43
      %p45 = scmp.ne.s32.totalorder %s31, %s32
      %p46 = scmp.eq.s32.totalorder %s24, 1
      %p47 = por %p45, %p46
      %p49 = scmp.ne.s32.totalorder %s32, %s48
      %p50 = scmp.eq.s32.totalorder %s24, 0
      %p51 = por %p49, %p50
      %s53 = sadd.s32 %s52, 1
      %p56 = scmp.eq.s32.totalorder %s18, 1
      %p57 = scmp.ne.s32.totalorder %s52, %s54
      %p58 = scmp.eq.s32.totalorder %s18, 0
      %p59 = por %p57, %p58
      %p60 = scmp.ne.s32.totalorder %s52, %s54
      %p61 = scmp.eq.s32.totalorder %s23, 1
      %p62 = por %p60, %p61
      %p63 = scmp.ne.s32.totalorder %s54, %s55
      %p64 = scmp.eq.s32.totalorder %s23, 0
      %p65 = por %p63, %p64
      %p66 = scmp.ne.s32.totalorder %s54, %s55
      %p67 = scmp.eq.s32.totalorder %s24, 1
      %p68 = por %p66, %p67
      %p70 = scmp.ne.s32.totalorder %s55, %s69
      %p71 = scmp.eq.s32.totalorder %s24, 0
      %p72 = por %p70, %p71
      %s74 = sadd.s32 %s73, 1
      %p77 = scmp.eq.s32.totalorder %s18, 1
      %p78 = scmp.ne.s32.totalorder %s73, %s75
      %p79 = scmp.eq.s32.totalorder %s18, 0
      %p80 = por %p78, %p79
      %p81 = scmp.ne.s32.totalorder %s73, %s75
      %p82 = scmp.eq.s32.totalorder %s23, 1
      %p83 = por %p81, %p82
      %p84 = scmp.ne.s32.totalorder %s75, %s76
      %p85 = scmp.eq.s32.totalorder %s23, 0
      %p86 = por %p84, %p85
      %p87 = scmp.ne.s32.totalorder %s75, %s76
      %p88 = scmp.eq.s32.totalorder %s24, 1
      %p89 = por %p87, %p88
      %p91 = scmp.ne.s32.totalorder %s76, %s90
      %p92 = scmp.eq.s32.totalorder %s24, 0
      %p93 = por %p91, %p92
      %s95 = sadd.s32 %s94, 1
      %p98 = scmp.eq.s32.totalorder %s18, 1
      %p99 = scmp.ne.s32.totalorder %s94, %s96
      %p100 = scmp.eq.s32.totalorder %s18, 0
      %p101 = por %p99, %p100
      %p102 = scmp.ne.s32.totalorder %s94, %s96
      %p103 = scmp.eq.s32.totalorder %s23, 1
      %p104 = por %p102, %p103
      %p105 = scmp.ne.s32.totalorder %s96, %s97
      %p106 = scmp.eq.s32.totalorder %s23, 0
      %p107 = por %p105, %p106
      %p108 = scmp.ne.s32.totalorder %s96, %s97
      %p109 = scmp.eq.s32.totalorder %s24, 1
      %p110 = por %p108, %p109
      %p112 = scmp.ne.s32.totalorder %s97, %s111
      %p113 = scmp.eq.s32.totalorder %s24, 0
      %p114 = por %p112, %p113
      %s116 = sadd.s32 %s115, 1
      %p119 = scmp.eq.s32.totalorder %s18, 1
      %p120 = scmp.ne.s32.totalorder %s115, %s117
      %p121 = scmp.eq.s32.totalorder %s18, 0
      %p122 = por %p120, %p121
      %p123 = scmp.ne.s32.totalorder %s115, %s117
      %p124 = scmp.eq.s32.totalorder %s23, 1
      %p125 = por %p123, %p124
      %p126 = scmp.ne.s32.totalorder %s117, %s118
      %p127 = scmp.eq.s32.totalorder %s23, 0
      %p128 = por %p126, %p127
      %p129 = scmp.ne.s32.totalorder %s117, %s118
      %p130 = scmp.eq.s32.totalorder %s24, 1
      %p131 = por %p129, %p130
      %p133 = scmp.ne.s32.totalorder %s118, %s132
      %p134 = scmp.eq.s32.totalorder %s24, 0
      %p135 = por %p133, %p134
      %s136 = ssub.s32 %s18, %s25
      %p137 = scmp.eq.s32.totalorder %s136, 0
      %s139 = sadd.s32 %s138, 1
      %s140 = scalar_select %p137, %s138, %s139
      %p143 = pneg %p137
      %p144 = scmp.eq.s32.totalorder %s18, 1
      %p145 = por %p143, %p144
      %p146 = scmp.ne.s32.totalorder %s138, %s141
      %p147 = scmp.eq.s32.totalorder %s18, 0
      %p148 = por %p146, %p147
      %p149 = scmp.ne.s32.totalorder %s138, %s141
      %p150 = scmp.eq.s32.totalorder %s23, 1
      %p151 = por %p149, %p150
      %p152 = scmp.ne.s32.totalorder %s141, %s142
      %p153 = scmp.eq.s32.totalorder %s23, 0
      %p154 = por %p152, %p153
      %p155 = scmp.ne.s32.totalorder %s141, %s142
      %p156 = scmp.eq.s32.totalorder %s24, 1
      %p157 = por %p155, %p156
      %p159 = scmp.ne.s32.totalorder %s142, %s158
      %p160 = scmp.eq.s32.totalorder %s24, 0
      %p161 = por %p159, %p160
      %p162 = scmp.le.s32.totalorder 1, %s18
      %p163 = scmp.lt.s32.totalorder %s18, 3
      %p164 = pnand %p162, %p163
      %p165 = pneg %p164
      // Predicated region
      $region9: #{mlp_forward_pallas.1} parent=5 // pred_check
        _
      $region10: #{mlp_forward_pallas.1} parent=5 // pred_check_branch
        %167 = sbr.rel (%p164) target = $region12
      $region11: #{mlp_forward_pallas.1} parent=5 // pred_region
        %s168 = ssub.s32 %s18, 1
        // Predicated region
        $region13: #{mlp_forward_pallas.1} parent=11 // pred_check
          %p169 = pneg %p65
        $region14: #{mlp_forward_pallas.1} parent=11 // pred_check_branch
          %171 = sbr.rel (%p169) target = $region16
        $region15: #{mlp_forward_pallas.1} parent=11 // pred_region
          %173 = vsyncadd [#allocation6], 0
          %s174 = sshll.u32 %s1, 4
          %s175 = int_to_ptr.hbm [resolvable:$true] %s174
          %s176 = sshll.u32 [#allocation5], 4
          %s177 = int_to_ptr.vmem [resolvable:$true] %s176
          %182 = dma.hbm_to_vmem [thread:$0]  %s175, 1024, %s177, [#allocation6], 64, 64, 4
        $region16: #{mlp_forward_pallas.1} parent=11 // pred_fallthru
          _
        // Predicated region
        $region17: #{mlp_forward_pallas.1} parent=11 // pred_check
          %p183 = pneg %p86
        $region18: #{mlp_forward_pallas.1} parent=11 // pred_check_branch
          %185 = sbr.rel (%p183) target = $region20
        $region19: #{mlp_forward_pallas.1} parent=11 // pred_region
          _
        $region20: #{mlp_forward_pallas.1} parent=11 // pred_fallthru
          _
        // Predicated region
        $region21: #{mlp_forward_pallas.1} parent=11 // pred_check
          %p186 = pneg %p107
        $region22: #{mlp_forward_pallas.1} parent=11 // pred_check_branch
          %188 = sbr.rel (%p186) target = $region24
        $region23: #{mlp_forward_pallas.1} parent=11 // pred_region
          %190 = vsyncadd [#allocation6], 0
          %s191 = sshll.u32 %s3, 4
          %s192 = int_to_ptr.hbm [resolvable:$true] %s191
          %s193 = sshll.u32 [#allocation7], 4
          %s194 = int_to_ptr.vmem [resolvable:$true] %s193
          %199 = dma.hbm_to_vmem [thread:$0]  %s192, 1024, %s194, [#allocation6], 64, 64, 4
        $region24: #{mlp_forward_pallas.1} parent=11 // pred_fallthru
          _
        // Predicated region
        $region25: #{mlp_forward_pallas.1} parent=11 // pred_check
          %p200 = pneg %p128
        $region26: #{mlp_forward_pallas.1} parent=11 // pred_check_branch
          %202 = sbr.rel (%p200) target = $region28
        $region27: #{mlp_forward_pallas.1} parent=11 // pred_region
          _
        $region28: #{mlp_forward_pallas.1} parent=11 // pred_fallthru
          _
      $region12: #{mlp_forward_pallas.1} parent=5 // pred_fallthru
        _
      %p203 = scmp.lt.s32.totalorder %s18, 2
      // Predicated region
      $region29: #{mlp_forward_pallas.1} parent=5 // pred_check
        %p204 = pneg %p203
      $region30: #{mlp_forward_pallas.1} parent=5 // pred_check_branch
        %206 = sbr.rel (%p204) target = $region32
      $region31: #{mlp_forward_pallas.1} parent=5 // pred_region
        // Predicated region
        $region33: #{mlp_forward_pallas.1} parent=31 // pred_check
          %p207 = pneg %p38
        $region34: #{mlp_forward_pallas.1} parent=31 // pred_check_branch
          %209 = sbr.rel (%p207) target = $region36
        $region35: #{mlp_forward_pallas.1} parent=31 // pred_region
          %s210 = sand.u32 %s28, 1
          %s211 = scalar_lea.sflag [#allocation3], %s210
          %s212 = sand.u32 %s28, 1
          %s213 = smul.addr %s212, 256
          %s214 = scalar_lea.vmem [#allocation2], %s213
          %s215 = smul.u32 64, %s18
          %217 = vsyncadd %s211, 0
          %s218 = smul.addr %s215, 4
          %s219 = scalar_lea.hbm %s0, %s218
          %s220 = sshll.u32 %s219, 4
          %s221 = int_to_ptr.hbm [resolvable:$true] %s220
          %s222 = sshll.u32 %s214, 4
          %s223 = int_to_ptr.vmem [resolvable:$true] %s222
          %228 = dma.hbm_to_vmem [thread:$0]  %s221, 4096, %s223, %s211, 64, 64, 4
        $region36: #{mlp_forward_pallas.1} parent=31 // pred_fallthru
          _
      $region32: #{mlp_forward_pallas.1} parent=5 // pred_fallthru
        _
      %p229 = scmp.le.s32.totalorder 1, %s18
      %p230 = scmp.lt.s32.totalorder %s18, 3
      %p231 = pnand %p229, %p230
      %p232 = pneg %p231
      // Predicated region
      $region37: #{mlp_forward_pallas.1} parent=5 // pred_check
        _
      $region38: #{mlp_forward_pallas.1} parent=5 // pred_check_branch
        %234 = sbr.rel (%p231) target = $region40
      $region39: #{mlp_forward_pallas.1} parent=5 // pred_region
        %s235 = ssub.s32 %s18, 1
        %s236 = sand.u32 %s31, 1
        %s237 = scalar_lea.sflag [#allocation3], %s236
        %s238 = sand.u32 %s31, 1
        %s239 = smul.addr %s238, 256
        %s240 = scalar_lea.vmem [#allocation2], %s239
        // Predicated region
        $region41: #{mlp_forward_pallas.1} parent=39 // pred_check
          %p241 = pneg %p44
        $region42: #{mlp_forward_pallas.1} parent=39 // pred_check_branch
          %243 = sbr.rel (%p241) target = $region44
        $region43: #{mlp_forward_pallas.1} parent=39 // pred_region
          %245 = dma.done %s237, 4096
        $region44: #{mlp_forward_pallas.1} parent=39 // pred_fallthru
          _
        // Predicated region
        $region45: #{mlp_forward_pallas.1} parent=39 // pred_check
          %p246 = pneg %p65
        $region46: #{mlp_forward_pallas.1} parent=39 // pred_check_branch
          %248 = sbr.rel (%p246) target = $region48
        $region47: #{mlp_forward_pallas.1} parent=39 // pred_region
          %250 = dma.done [#allocation6], 1024
        $region48: #{mlp_forward_pallas.1} parent=39 // pred_fallthru
          _
        // Predicated region
        $region49: #{mlp_forward_pallas.1} parent=39 // pred_check
          %p251 = pneg %p107
        $region50: #{mlp_forward_pallas.1} parent=39 // pred_check_branch
          %253 = sbr.rel (%p251) target = $region52
        $region51: #{mlp_forward_pallas.1} parent=39 // pred_region
          %255 = dma.done [#allocation6], 1024
        $region52: #{mlp_forward_pallas.1} parent=39 // pred_fallthru
          _
        %s256 = sand.u32 %s31, 1
        %s257 = scalar_lea.sflag [#allocation3], %s256
        %s258 = sand.u32 %s31, 1
        %s259 = smul.addr %s258, 256
        %s260 = scalar_lea.vmem [#allocation2], %s259
        %p261 = pneg %p44
        %p262 = pneg %p41
        %p263 = pneg %p65
        %p264 = pneg %p62
        %p265 = pneg %p86
        %p266 = pneg %p83
        %p267 = pneg %p107
        %p268 = pneg %p104
        %p269 = pneg %p128
        %p270 = pneg %p125
        %p271 = pneg %p154
        %p272 = pneg %p151
        %s273 = sand.u32 %s141, 1
        %s274 = scalar_lea.sflag [#allocation4], %s273
        %s275 = sand.u32 %s141, 1
        %s276 = smul.addr %s275, 256
        %s277 = scalar_lea.vmem [#allocation8], %s276
        %s278 = smul.u32 64, %s23
        %s279 = smul.u32 64, %s23
        %v280 = vld [vmem:[%s240] sm:$0xf]
        %v281 = vld [vmem:[%s240 + $0x4] sm:$0xf]
        %v282 = vld [vmem:[%s240 + $0x8] sm:$0xf]
        %v283 = vld [vmem:[%s240 + $0xc] sm:$0xf]
        %v284 = vld [vmem:[%s240 + $0x10] sm:$0xf]
        %v285 = vld [vmem:[%s240 + $0x14] sm:$0xf]
        %v286 = vld [vmem:[%s240 + $0x18] sm:$0xf]
        %v287 = vld [vmem:[%s240 + $0x1c] sm:$0xf]
        %v288 = vld [vmem:[%s240 + $0x20] sm:$0xf]
        %v289 = vld [vmem:[%s240 + $0x24] sm:$0xf]
        %v290 = vld [vmem:[%s240 + $0x28] sm:$0xf]
        %v291 = vld [vmem:[%s240 + $0x2c] sm:$0xf]
        %v292 = vld [vmem:[%s240 + $0x30] sm:$0xf]
        %v293 = vld [vmem:[%s240 + $0x34] sm:$0xf]
        %v294 = vld [vmem:[%s240 + $0x38] sm:$0xf]
        %v295 = vld [vmem:[%s240 + $0x3c] sm:$0xf]
        %v296 = vld [vmem:[%s240 + $0x40] sm:$0xf]
        %v297 = vld [vmem:[%s240 + $0x44] sm:$0xf]
        %v298 = vld [vmem:[%s240 + $0x48] sm:$0xf]
        %v299 = vld [vmem:[%s240 + $0x4c] sm:$0xf]
        %v300 = vld [vmem:[%s240 + $0x50] sm:$0xf]
        %v301 = vld [vmem:[%s240 + $0x54] sm:$0xf]
        %v302 = vld [vmem:[%s240 + $0x58] sm:$0xf]
        %v303 = vld [vmem:[%s240 + $0x5c] sm:$0xf]
        %v304 = vld [vmem:[%s240 + $0x60] sm:$0xf]
        %v305 = vld [vmem:[%s240 + $0x64] sm:$0xf]
        %v306 = vld [vmem:[%s240 + $0x68] sm:$0xf]
        %v307 = vld [vmem:[%s240 + $0x6c] sm:$0xf]
        %v308 = vld [vmem:[%s240 + $0x70] sm:$0xf]
        %v309 = vld [vmem:[%s240 + $0x74] sm:$0xf]
        %v310 = vld [vmem:[%s240 + $0x78] sm:$0xf]
        %v311 = vld [vmem:[%s240 + $0x7c] sm:$0xf]
        %v312 = vld [vmem:[%s240 + $0x80] sm:$0xf]
        %v313 = vld [vmem:[%s240 + $0x84] sm:$0xf]
        %v314 = vld [vmem:[%s240 + $0x88] sm:$0xf]
        %v315 = vld [vmem:[%s240 + $0x8c] sm:$0xf]
        %v316 = vld [vmem:[%s240 + $0x90] sm:$0xf]
        %v317 = vld [vmem:[%s240 + $0x94] sm:$0xf]
        %v318 = vld [vmem:[%s240 + $0x98] sm:$0xf]
        %v319 = vld [vmem:[%s240 + $0x9c] sm:$0xf]
        %v320 = vld [vmem:[%s240 + $0xa0] sm:$0xf]
        %v321 = vld [vmem:[%s240 + $0xa4] sm:$0xf]
        %v322 = vld [vmem:[%s240 + $0xa8] sm:$0xf]
        %v323 = vld [vmem:[%s240 + $0xac] sm:$0xf]
        %v324 = vld [vmem:[%s240 + $0xb0] sm:$0xf]
        %v325 = vld [vmem:[%s240 + $0xb4] sm:$0xf]
        %v326 = vld [vmem:[%s240 + $0xb8] sm:$0xf]
        %v327 = vld [vmem:[%s240 + $0xbc] sm:$0xf]
        %v328 = vld [vmem:[%s240 + $0xc0] sm:$0xf]
        %v329 = vld [vmem:[%s240 + $0xc4] sm:$0xf]
        %v330 = vld [vmem:[%s240 + $0xc8] sm:$0xf]
        %v331 = vld [vmem:[%s240 + $0xcc] sm:$0xf]
        %v332 = vld [vmem:[%s240 + $0xd0] sm:$0xf]
        %v333 = vld [vmem:[%s240 + $0xd4] sm:$0xf]
        %v334 = vld [vmem:[%s240 + $0xd8] sm:$0xf]
        %v335 = vld [vmem:[%s240 + $0xdc] sm:$0xf]
        %v336 = vld [vmem:[%s240 + $0xe0] sm:$0xf]
        %v337 = vld [vmem:[%s240 + $0xe4] sm:$0xf]
        %v338 = vld [vmem:[%s240 + $0xe8] sm:$0xf]
        %v339 = vld [vmem:[%s240 + $0xec] sm:$0xf]
        %v340 = vld [vmem:[%s240 + $0xf0] sm:$0xf]
        %v341 = vld [vmem:[%s240 + $0xf4] sm:$0xf]
        %v342 = vld [vmem:[%s240 + $0xf8] sm:$0xf]
        %v343 = vld [vmem:[%s240 + $0xfc] sm:$0xf]
        %v344 = vld [vmem:[#allocation5] sm:$0xf]
        %v345 = vld [vmem:[#allocation5 + $0x4] sm:$0xf]
        %v346 = vld [vmem:[#allocation5 + $0x8] sm:$0xf]
        %v347 = vld [vmem:[#allocation5 + $0xc] sm:$0xf]
        %v348 = vld [vmem:[#allocation5 + $0x10] sm:$0xf]
        %v349 = vld [vmem:[#allocation5 + $0x14] sm:$0xf]
        %v350 = vld [vmem:[#allocation5 + $0x18] sm:$0xf]
        %v351 = vld [vmem:[#allocation5 + $0x1c] sm:$0xf]
        %v352 = vld [vmem:[#allocation5 + $0x20] sm:$0xf]
        %v353 = vld [vmem:[#allocation5 + $0x24] sm:$0xf]
        %v354 = vld [vmem:[#allocation5 + $0x28] sm:$0xf]
        %v355 = vld [vmem:[#allocation5 + $0x2c] sm:$0xf]
        %v356 = vld [vmem:[#allocation5 + $0x30] sm:$0xf]
        %v357 = vld [vmem:[#allocation5 + $0x34] sm:$0xf]
        %v358 = vld [vmem:[#allocation5 + $0x38] sm:$0xf]
        %v359 = vld [vmem:[#allocation5 + $0x3c] sm:$0xf]
        %v360 = vld [vmem:[%s2] sm:$0x1]
        %v362 = vperm.slane %v360, 0
        %v428 = vunpack.c.l.b16 %v280
        %v429 = vunpack.c.l.b16 %v281
        %v430 = vunpack.c.l.b16 %v282
        %v431 = vunpack.c.l.b16 %v283
        %v432 = vunpack.c.l.b16 %v284
        %v433 = vunpack.c.l.b16 %v285
        %v434 = vunpack.c.l.b16 %v286
        %v435 = vunpack.c.l.b16 %v287
        %v436 = vunpack.c.l.b16 %v288
        %v437 = vunpack.c.l.b16 %v289
        %v438 = vunpack.c.l.b16 %v290
        %v439 = vunpack.c.l.b16 %v291
        %v440 = vunpack.c.l.b16 %v292
        %v441 = vunpack.c.l.b16 %v293
        %v442 = vunpack.c.l.b16 %v294
        %v443 = vunpack.c.l.b16 %v295
        %v444 = vunpack.c.l.b16 %v296
        %v445 = vunpack.c.l.b16 %v297
        %v446 = vunpack.c.l.b16 %v298
        %v447 = vunpack.c.l.b16 %v299
        %v448 = vunpack.c.l.b16 %v300
        %v449 = vunpack.c.l.b16 %v301
        %v450 = vunpack.c.l.b16 %v302
        %v451 = vunpack.c.l.b16 %v303
        %v452 = vunpack.c.l.b16 %v304
        %v453 = vunpack.c.l.b16 %v305
        %v454 = vunpack.c.l.b16 %v306
        %v455 = vunpack.c.l.b16 %v307
        %v456 = vunpack.c.l.b16 %v308
        %v457 = vunpack.c.l.b16 %v309
        %v458 = vunpack.c.l.b16 %v310
        %v459 = vunpack.c.l.b16 %v311
        %v460 = vunpack.c.l.b16 %v312
        %v461 = vunpack.c.l.b16 %v313
        %v462 = vunpack.c.l.b16 %v314
        %v463 = vunpack.c.l.b16 %v315
        %v464 = vunpack.c.l.b16 %v316
        %v465 = vunpack.c.l.b16 %v317
        %v466 = vunpack.c.l.b16 %v318
        %v467 = vunpack.c.l.b16 %v319
        %v468 = vunpack.c.l.b16 %v320
        %v469 = vunpack.c.l.b16 %v321
        %v470 = vunpack.c.l.b16 %v322
        %v471 = vunpack.c.l.b16 %v323
        %v472 = vunpack.c.l.b16 %v324
        %v473 = vunpack.c.l.b16 %v325
        %v474 = vunpack.c.l.b16 %v326
        %v475 = vunpack.c.l.b16 %v327
        %v476 = vunpack.c.l.b16 %v328
        %v477 = vunpack.c.l.b16 %v329
        %v478 = vunpack.c.l.b16 %v330
        %v479 = vunpack.c.l.b16 %v331
        %v480 = vunpack.c.l.b16 %v332
        %v481 = vunpack.c.l.b16 %v333
        %v482 = vunpack.c.l.b16 %v334
        %v483 = vunpack.c.l.b16 %v335
        %v484 = vunpack.c.l.b16 %v336
        %v485 = vunpack.c.l.b16 %v337
        %v486 = vunpack.c.l.b16 %v338
        %v487 = vunpack.c.l.b16 %v339
        %v488 = vunpack.c.l.b16 %v340
        %v489 = vunpack.c.l.b16 %v341
        %v490 = vunpack.c.l.b16 %v342
        %v491 = vunpack.c.l.b16 %v343
        %v492 = vpack.c.b16 %v429, %v428
        %v493 = vpack.c.b16 %v431, %v430
        %v494 = vpack.c.b16 %v433, %v432
        %v495 = vpack.c.b16 %v435, %v434
        %v496 = vpack.c.b16 %v437, %v436
        %v497 = vpack.c.b16 %v439, %v438
        %v498 = vpack.c.b16 %v441, %v440
        %v499 = vpack.c.b16 %v443, %v442
        %v500 = vpack.c.b16 %v445, %v444
        %v501 = vpack.c.b16 %v447, %v446
        %v502 = vpack.c.b16 %v449, %v448
        %v503 = vpack.c.b16 %v451, %v450
        %v504 = vpack.c.b16 %v453, %v452
        %v505 = vpack.c.b16 %v455, %v454
        %v506 = vpack.c.b16 %v457, %v456
        %v507 = vpack.c.b16 %v459, %v458
        %v508 = vpack.c.b16 %v461, %v460
        %v509 = vpack.c.b16 %v463, %v462
        %v510 = vpack.c.b16 %v465, %v464
        %v511 = vpack.c.b16 %v467, %v466
        %v512 = vpack.c.b16 %v469, %v468
        %v513 = vpack.c.b16 %v471, %v470
        %v514 = vpack.c.b16 %v473, %v472
        %v515 = vpack.c.b16 %v475, %v474
        %v516 = vpack.c.b16 %v477, %v476
        %v517 = vpack.c.b16 %v479, %v478
        %v518 = vpack.c.b16 %v481, %v480
        %v519 = vpack.c.b16 %v483, %v482
        %v520 = vpack.c.b16 %v485, %v484
        %v521 = vpack.c.b16 %v487, %v486
        %v522 = vpack.c.b16 %v489, %v488
        %v523 = vpack.c.b16 %v491, %v490
        %v572 = vunpack.c.l.b16 %v344
        %v573 = vunpack.c.l.b16 %v345
        %v574 = vunpack.c.l.b16 %v346
        %v575 = vunpack.c.l.b16 %v347
        %v576 = vunpack.c.l.b16 %v348
        %v577 = vunpack.c.l.b16 %v349
        %v578 = vunpack.c.l.b16 %v350
        %v579 = vunpack.c.l.b16 %v351
        %v580 = vunpack.c.l.b16 %v352
        %v581 = vunpack.c.l.b16 %v353
        %v582 = vunpack.c.l.b16 %v354
        %v583 = vunpack.c.l.b16 %v355
        %v584 = vunpack.c.l.b16 %v356
        %v585 = vunpack.c.l.b16 %v357
        %v586 = vunpack.c.l.b16 %v358
        %v587 = vunpack.c.l.b16 %v359
        %v588 = vpack.c.b16 %v573, %v572
        %v589 = vpack.c.b16 %v575, %v574
        %v590 = vpack.c.b16 %v577, %v576
        %v591 = vpack.c.b16 %v579, %v578
        %v592 = vpack.c.b16 %v581, %v580
        %v593 = vpack.c.b16 %v583, %v582
        %v594 = vpack.c.b16 %v585, %v584
        %v595 = vpack.c.b16 %v587, %v586
        %604 = vmatpush.bf16.msra.mxu0 %v595
        %605 = vmatpush.bf16.msra.mxu0 %v594
        %606 = vmatpush.bf16.msra.mxu0 %v593
        %607 = vmatpush.bf16.msra.mxu0 %v592
        %608 = vmatpush.bf16.msra.mxu0 %v591
        %609 = vmatpush.bf16.msra.mxu0 %v590
        %610 = vmatpush.bf16.msra.mxu0 %v589
        %611 = vmatpush.bf16.msra.mxu0 %v588
        %612 = vmatmul.bf16.gmra.mxu0 %v492
        %v613 = vpop.f32.mrf.mxu0
        %v614 = vadd.f32 %v362, %v613
        %v615 = vpop.f32.mrf.mxu0
        %v616 = vadd.f32 %v362, %v615
        %617 = vmatmul.bf16.gmra.mxu0 %v493
        %v618 = vpop.f32.mrf.mxu0
        %v619 = vadd.f32 %v362, %v618
        %v620 = vpop.f32.mrf.mxu0
        %v621 = vadd.f32 %v362, %v620
        %622 = vmatmul.bf16.gmra.mxu0 %v494
        %v623 = vpop.f32.mrf.mxu0
        %v624 = vadd.f32 %v362, %v623
        %v625 = vpop.f32.mrf.mxu0
        %v626 = vadd.f32 %v362, %v625
        %627 = vmatmul.bf16.gmra.mxu0 %v495
        %v628 = vpop.f32.mrf.mxu0
        %v629 = vadd.f32 %v362, %v628
        %v630 = vpop.f32.mrf.mxu0
        %v631 = vadd.f32 %v362, %v630
        %632 = vmatmul.bf16.gmra.mxu0 %v496
        %v633 = vpop.f32.mrf.mxu0
        %v634 = vadd.f32 %v362, %v633
        %v635 = vpop.f32.mrf.mxu0
        %v636 = vadd.f32 %v362, %v635
        %637 = vmatmul.bf16.gmra.mxu0 %v497
        %v638 = vpop.f32.mrf.mxu0
        %v639 = vadd.f32 %v362, %v638
        %v640 = vpop.f32.mrf.mxu0
        %v641 = vadd.f32 %v362, %v640
        %642 = vmatmul.bf16.gmra.mxu0 %v498
        %v643 = vpop.f32.mrf.mxu0
        %v644 = vadd.f32 %v362, %v643
        %v645 = vpop.f32.mrf.mxu0
        %v646 = vadd.f32 %v362, %v645
        %647 = vmatmul.bf16.gmra.mxu0 %v499
        %v648 = vpop.f32.mrf.mxu0
        %v649 = vadd.f32 %v362, %v648
        %v650 = vpop.f32.mrf.mxu0
        %v651 = vadd.f32 %v362, %v650
        %652 = vmatmul.bf16.gmra.mxu0 %v500
        %v653 = vpop.f32.mrf.mxu0
        %v654 = vadd.f32 %v362, %v653
        %v655 = vpop.f32.mrf.mxu0
        %v656 = vadd.f32 %v362, %v655
        %657 = vmatmul.bf16.gmra.mxu0 %v501
        %v658 = vpop.f32.mrf.mxu0
        %v659 = vadd.f32 %v362, %v658
        %v660 = vpop.f32.mrf.mxu0
        %v661 = vadd.f32 %v362, %v660
        %662 = vmatmul.bf16.gmra.mxu0 %v502
        %v663 = vpop.f32.mrf.mxu0
        %v664 = vadd.f32 %v362, %v663
        %v665 = vpop.f32.mrf.mxu0
        %v666 = vadd.f32 %v362, %v665
        %667 = vmatmul.bf16.gmra.mxu0 %v503
        %v668 = vpop.f32.mrf.mxu0
        %v669 = vadd.f32 %v362, %v668
        %v670 = vpop.f32.mrf.mxu0
        %v671 = vadd.f32 %v362, %v670
        %672 = vmatmul.bf16.gmra.mxu0 %v504
        %v673 = vpop.f32.mrf.mxu0
        %v674 = vadd.f32 %v362, %v673
        %v675 = vpop.f32.mrf.mxu0
        %v676 = vadd.f32 %v362, %v675
        %677 = vmatmul.bf16.gmra.mxu0 %v505
        %v678 = vpop.f32.mrf.mxu0
        %v679 = vadd.f32 %v362, %v678
        %v680 = vpop.f32.mrf.mxu0
        %v681 = vadd.f32 %v362, %v680
        %682 = vmatmul.bf16.gmra.mxu0 %v506
        %v683 = vpop.f32.mrf.mxu0
        %v684 = vadd.f32 %v362, %v683
        %v685 = vpop.f32.mrf.mxu0
        %v686 = vadd.f32 %v362, %v685
        %687 = vmatmul.bf16.gmra.mxu0 %v507
        %v688 = vpop.f32.mrf.mxu0
        %v689 = vadd.f32 %v362, %v688
        %v690 = vpop.f32.mrf.mxu0
        %v691 = vadd.f32 %v362, %v690
        %692 = vmatmul.bf16.gmra.mxu0 %v508
        %v693 = vpop.f32.mrf.mxu0
        %v694 = vadd.f32 %v362, %v693
        %v695 = vpop.f32.mrf.mxu0
        %v696 = vadd.f32 %v362, %v695
        %697 = vmatmul.bf16.gmra.mxu0 %v509
        %v698 = vpop.f32.mrf.mxu0
        %v699 = vadd.f32 %v362, %v698
        %v700 = vpop.f32.mrf.mxu0
        %v701 = vadd.f32 %v362, %v700
        %702 = vmatmul.bf16.gmra.mxu0 %v510
        %v703 = vpop.f32.mrf.mxu0
        %v704 = vadd.f32 %v362, %v703
        %v705 = vpop.f32.mrf.mxu0
        %v706 = vadd.f32 %v362, %v705
        %707 = vmatmul.bf16.gmra.mxu0 %v511
        %v708 = vpop.f32.mrf.mxu0
        %v709 = vadd.f32 %v362, %v708
        %v710 = vpop.f32.mrf.mxu0
        %v711 = vadd.f32 %v362, %v710
        %712 = vmatmul.bf16.gmra.mxu0 %v512
        %v713 = vpop.f32.mrf.mxu0
        %v714 = vadd.f32 %v362, %v713
        %v715 = vpop.f32.mrf.mxu0
        %v716 = vadd.f32 %v362, %v715
        %717 = vmatmul.bf16.gmra.mxu0 %v513
        %v718 = vpop.f32.mrf.mxu0
        %v719 = vadd.f32 %v362, %v718
        %v720 = vpop.f32.mrf.mxu0
        %v721 = vadd.f32 %v362, %v720
        %722 = vmatmul.bf16.gmra.mxu0 %v514
        %v723 = vpop.f32.mrf.mxu0
        %v724 = vadd.f32 %v362, %v723
        %v725 = vpop.f32.mrf.mxu0
        %v726 = vadd.f32 %v362, %v725
        %727 = vmatmul.bf16.gmra.mxu0 %v515
        %v728 = vpop.f32.mrf.mxu0
        %v729 = vadd.f32 %v362, %v728
        %v730 = vpop.f32.mrf.mxu0
        %v731 = vadd.f32 %v362, %v730
        %732 = vmatmul.bf16.gmra.mxu0 %v516
        %v733 = vpop.f32.mrf.mxu0
        %v734 = vadd.f32 %v362, %v733
        %v735 = vpop.f32.mrf.mxu0
        %v736 = vadd.f32 %v362, %v735
        %737 = vmatmul.bf16.gmra.mxu0 %v517
        %v738 = vpop.f32.mrf.mxu0
        %v739 = vadd.f32 %v362, %v738
        %v740 = vpop.f32.mrf.mxu0
        %v741 = vadd.f32 %v362, %v740
        %742 = vmatmul.bf16.gmra.mxu0 %v518
        %v743 = vpop.f32.mrf.mxu0
        %v744 = vadd.f32 %v362, %v743
        %v745 = vpop.f32.mrf.mxu0
        %v746 = vadd.f32 %v362, %v745
        %747 = vmatmul.bf16.gmra.mxu0 %v519
        %v748 = vpop.f32.mrf.mxu0
        %v749 = vadd.f32 %v362, %v748
        %v750 = vpop.f32.mrf.mxu0
        %v751 = vadd.f32 %v362, %v750
        %752 = vmatmul.bf16.gmra.mxu0 %v520
        %v753 = vpop.f32.mrf.mxu0
        %v754 = vadd.f32 %v362, %v753
        %v755 = vpop.f32.mrf.mxu0
        %v756 = vadd.f32 %v362, %v755
        %757 = vmatmul.bf16.gmra.mxu0 %v521
        %v758 = vpop.f32.mrf.mxu0
        %v759 = vadd.f32 %v362, %v758
        %v760 = vpop.f32.mrf.mxu0
        %v761 = vadd.f32 %v362, %v760
        %762 = vmatmul.bf16.gmra.mxu0 %v522
        %v763 = vpop.f32.mrf.mxu0
        %v764 = vadd.f32 %v362, %v763
        %v765 = vpop.f32.mrf.mxu0
        %v766 = vadd.f32 %v362, %v765
        %767 = vmatmul.bf16.gmra.mxu0 %v523
        %v768 = vpop.f32.mrf.mxu0
        %v769 = vadd.f32 %v362, %v768
        %v770 = vpop.f32.mrf.mxu0
        %v771 = vadd.f32 %v362, %v770
        %772 = vdwg.mxu0
        %v773 = vmax.f32 %v614, 0.0
        %v774 = vmax.f32 %v616, 0.0
        %v775 = vmax.f32 %v619, 0.0
        %v776 = vmax.f32 %v621, 0.0
        %v777 = vmax.f32 %v624, 0.0
        %v778 = vmax.f32 %v626, 0.0
        %v779 = vmax.f32 %v629, 0.0
        %v780 = vmax.f32 %v631, 0.0
        %v781 = vmax.f32 %v634, 0.0
        %v782 = vmax.f32 %v636, 0.0
        %v783 = vmax.f32 %v639, 0.0
        %v784 = vmax.f32 %v641, 0.0
        %v785 = vmax.f32 %v644, 0.0
        %v786 = vmax.f32 %v646, 0.0
        %v787 = vmax.f32 %v649, 0.0
        %v788 = vmax.f32 %v651, 0.0
        %v789 = vmax.f32 %v654, 0.0
        %v790 = vmax.f32 %v656, 0.0
        %v791 = vmax.f32 %v659, 0.0
        %v792 = vmax.f32 %v661, 0.0
        %v793 = vmax.f32 %v664, 0.0
        %v794 = vmax.f32 %v666, 0.0
        %v795 = vmax.f32 %v669, 0.0
        %v796 = vmax.f32 %v671, 0.0
        %v797 = vmax.f32 %v674, 0.0
        %v798 = vmax.f32 %v676, 0.0
        %v799 = vmax.f32 %v679, 0.0
        %v800 = vmax.f32 %v681, 0.0
        %v801 = vmax.f32 %v684, 0.0
        %v802 = vmax.f32 %v686, 0.0
        %v803 = vmax.f32 %v689, 0.0
        %v804 = vmax.f32 %v691, 0.0
        %v805 = vmax.f32 %v694, 0.0
        %v806 = vmax.f32 %v696, 0.0
        %v807 = vmax.f32 %v699, 0.0
        %v808 = vmax.f32 %v701, 0.0
        %v809 = vmax.f32 %v704, 0.0
        %v810 = vmax.f32 %v706, 0.0
        %v811 = vmax.f32 %v709, 0.0
        %v812 = vmax.f32 %v711, 0.0
        %v813 = vmax.f32 %v714, 0.0
        %v814 = vmax.f32 %v716, 0.0
        %v815 = vmax.f32 %v719, 0.0
        %v816 = vmax.f32 %v721, 0.0
        %v817 = vmax.f32 %v724, 0.0
        %v818 = vmax.f32 %v726, 0.0
        %v819 = vmax.f32 %v729, 0.0
        %v820 = vmax.f32 %v731, 0.0
        %v821 = vmax.f32 %v734, 0.0
        %v822 = vmax.f32 %v736, 0.0
        %v823 = vmax.f32 %v739, 0.0
        %v824 = vmax.f32 %v741, 0.0
        %v825 = vmax.f32 %v744, 0.0
        %v826 = vmax.f32 %v746, 0.0
        %v827 = vmax.f32 %v749, 0.0
        %v828 = vmax.f32 %v751, 0.0
        %v829 = vmax.f32 %v754, 0.0
        %v830 = vmax.f32 %v756, 0.0
        %v831 = vmax.f32 %v759, 0.0
        %v832 = vmax.f32 %v761, 0.0
        %v833 = vmax.f32 %v764, 0.0
        %v834 = vmax.f32 %v766, 0.0
        %v835 = vmax.f32 %v769, 0.0
        %v836 = vmax.f32 %v771, 0.0
        %v837 = vpack.c.bf16 %v774, %v773
        %v838 = vpack.c.bf16 %v776, %v775
        %v839 = vpack.c.bf16 %v778, %v777
        %v840 = vpack.c.bf16 %v780, %v779
        %v841 = vpack.c.bf16 %v782, %v781
        %v842 = vpack.c.bf16 %v784, %v783
        %v843 = vpack.c.bf16 %v786, %v785
        %v844 = vpack.c.bf16 %v788, %v787
        %v845 = vpack.c.bf16 %v790, %v789
        %v846 = vpack.c.bf16 %v792, %v791
        %v847 = vpack.c.bf16 %v794, %v793
        %v848 = vpack.c.bf16 %v796, %v795
        %v849 = vpack.c.bf16 %v798, %v797
        %v850 = vpack.c.bf16 %v800, %v799
        %v851 = vpack.c.bf16 %v802, %v801
        %v852 = vpack.c.bf16 %v804, %v803
        %v853 = vpack.c.bf16 %v806, %v805
        %v854 = vpack.c.bf16 %v808, %v807
        %v855 = vpack.c.bf16 %v810, %v809
        %v856 = vpack.c.bf16 %v812, %v811
        %v857 = vpack.c.bf16 %v814, %v813
        %v858 = vpack.c.bf16 %v816, %v815
        %v859 = vpack.c.bf16 %v818, %v817
        %v860 = vpack.c.bf16 %v820, %v819
        %v861 = vpack.c.bf16 %v822, %v821
        %v862 = vpack.c.bf16 %v824, %v823
        %v863 = vpack.c.bf16 %v826, %v825
        %v864 = vpack.c.bf16 %v828, %v827
        %v865 = vpack.c.bf16 %v830, %v829
        %v866 = vpack.c.bf16 %v832, %v831
        %v867 = vpack.c.bf16 %v834, %v833
        %v868 = vpack.c.bf16 %v836, %v835
        %v869 = vld [vmem:[#allocation7] sm:$0xf]
        %v870 = vld [vmem:[#allocation7 + $0x4] sm:$0xf]
        %v871 = vld [vmem:[#allocation7 + $0x8] sm:$0xf]
        %v872 = vld [vmem:[#allocation7 + $0xc] sm:$0xf]
        %v873 = vld [vmem:[#allocation7 + $0x10] sm:$0xf]
        %v874 = vld [vmem:[#allocation7 + $0x14] sm:$0xf]
        %v875 = vld [vmem:[#allocation7 + $0x18] sm:$0xf]
        %v876 = vld [vmem:[#allocation7 + $0x1c] sm:$0xf]
        %v877 = vld [vmem:[#allocation7 + $0x20] sm:$0xf]
        %v878 = vld [vmem:[#allocation7 + $0x24] sm:$0xf]
        %v879 = vld [vmem:[#allocation7 + $0x28] sm:$0xf]
        %v880 = vld [vmem:[#allocation7 + $0x2c] sm:$0xf]
        %v881 = vld [vmem:[#allocation7 + $0x30] sm:$0xf]
        %v882 = vld [vmem:[#allocation7 + $0x34] sm:$0xf]
        %v883 = vld [vmem:[#allocation7 + $0x38] sm:$0xf]
        %v884 = vld [vmem:[#allocation7 + $0x3c] sm:$0xf]
        %v885 = vld [vmem:[%s4] sm:$0x1]
        %v887 = vperm.slane %v885, 0
        %v905 = vunpack.c.l.b16 %v869
        %v906 = vunpack.c.l.b16 %v870
        %v907 = vunpack.c.l.b16 %v871
        %v908 = vunpack.c.l.b16 %v872
        %v909 = vunpack.c.l.b16 %v873
        %v910 = vunpack.c.l.b16 %v874
        %v911 = vunpack.c.l.b16 %v875
        %v912 = vunpack.c.l.b16 %v876
        %v913 = vunpack.c.l.b16 %v877
        %v914 = vunpack.c.l.b16 %v878
        %v915 = vunpack.c.l.b16 %v879
        %v916 = vunpack.c.l.b16 %v880
        %v917 = vunpack.c.l.b16 %v881
        %v918 = vunpack.c.l.b16 %v882
        %v919 = vunpack.c.l.b16 %v883
        %v920 = vunpack.c.l.b16 %v884
        %v921 = vpack.c.b16 %v906, %v905
        %v922 = vpack.c.b16 %v908, %v907
        %v923 = vpack.c.b16 %v910, %v909
        %v924 = vpack.c.b16 %v912, %v911
        %v925 = vpack.c.b16 %v914, %v913
        %v926 = vpack.c.b16 %v916, %v915
        %v927 = vpack.c.b16 %v918, %v917
        %v928 = vpack.c.b16 %v920, %v919
        %937 = vmatpush.bf16.msra.mxu0 %v928
        %938 = vmatpush.bf16.msra.mxu0 %v927
        %939 = vmatpush.bf16.msra.mxu0 %v926
        %940 = vmatpush.bf16.msra.mxu0 %v925
        %941 = vmatpush.bf16.msra.mxu0 %v924
        %942 = vmatpush.bf16.msra.mxu0 %v923
        %943 = vmatpush.bf16.msra.mxu0 %v922
        %944 = vmatpush.bf16.msra.mxu0 %v921
        %945 = vmatmul.bf16.gmra.mxu0 %v837
        %v946 = vpop.f32.mrf.mxu0
        %v947 = vadd.f32 %v887, %v946
        %v948 = vpop.f32.mrf.mxu0
        %v949 = vadd.f32 %v887, %v948
        %950 = vmatmul.bf16.gmra.mxu0 %v838
        %v951 = vpop.f32.mrf.mxu0
        %v952 = vadd.f32 %v887, %v951
        %v953 = vpop.f32.mrf.mxu0
        %v954 = vadd.f32 %v887, %v953
        %955 = vmatmul.bf16.gmra.mxu0 %v839
        %v956 = vpop.f32.mrf.mxu0
        %v957 = vadd.f32 %v887, %v956
        %v958 = vpop.f32.mrf.mxu0
        %v959 = vadd.f32 %v887, %v958
        %960 = vmatmul.bf16.gmra.mxu0 %v840
        %v961 = vpop.f32.mrf.mxu0
        %v962 = vadd.f32 %v887, %v961
        %v963 = vpop.f32.mrf.mxu0
        %v964 = vadd.f32 %v887, %v963
        %965 = vmatmul.bf16.gmra.mxu0 %v841
        %v966 = vpop.f32.mrf.mxu0
        %v967 = vadd.f32 %v887, %v966
        %v968 = vpop.f32.mrf.mxu0
        %v969 = vadd.f32 %v887, %v968
        %970 = vmatmul.bf16.gmra.mxu0 %v842
        %v971 = vpop.f32.mrf.mxu0
        %v972 = vadd.f32 %v887, %v971
        %v973 = vpop.f32.mrf.mxu0
        %v974 = vadd.f32 %v887, %v973
        %975 = vmatmul.bf16.gmra.mxu0 %v843
        %v976 = vpop.f32.mrf.mxu0
        %v977 = vadd.f32 %v887, %v976
        %v978 = vpop.f32.mrf.mxu0
        %v979 = vadd.f32 %v887, %v978
        %980 = vmatmul.bf16.gmra.mxu0 %v844
        %v981 = vpop.f32.mrf.mxu0
        %v982 = vadd.f32 %v887, %v981
        %v983 = vpop.f32.mrf.mxu0
        %v984 = vadd.f32 %v887, %v983
        %985 = vmatmul.bf16.gmra.mxu0 %v845
        %v986 = vpop.f32.mrf.mxu0
        %v987 = vadd.f32 %v887, %v986
        %v988 = vpop.f32.mrf.mxu0
        %v989 = vadd.f32 %v887, %v988
        %990 = vmatmul.bf16.gmra.mxu0 %v846
        %v991 = vpop.f32.mrf.mxu0
        %v992 = vadd.f32 %v887, %v991
        %v993 = vpop.f32.mrf.mxu0
        %v994 = vadd.f32 %v887, %v993
        %995 = vmatmul.bf16.gmra.mxu0 %v847
        %v996 = vpop.f32.mrf.mxu0
        %v997 = vadd.f32 %v887, %v996
        %v998 = vpop.f32.mrf.mxu0
        %v999 = vadd.f32 %v887, %v998
        %1000 = vmatmul.bf16.gmra.mxu0 %v848
        %v1001 = vpop.f32.mrf.mxu0
        %v1002 = vadd.f32 %v887, %v1001
        %v1003 = vpop.f32.mrf.mxu0
        %v1004 = vadd.f32 %v887, %v1003
        %1005 = vmatmul.bf16.gmra.mxu0 %v849
        %v1006 = vpop.f32.mrf.mxu0
        %v1007 = vadd.f32 %v887, %v1006
        %v1008 = vpop.f32.mrf.mxu0
        %v1009 = vadd.f32 %v887, %v1008
        %1010 = vmatmul.bf16.gmra.mxu0 %v850
        %v1011 = vpop.f32.mrf.mxu0
        %v1012 = vadd.f32 %v887, %v1011
        %v1013 = vpop.f32.mrf.mxu0
        %v1014 = vadd.f32 %v887, %v1013
        %1015 = vmatmul.bf16.gmra.mxu0 %v851
        %v1016 = vpop.f32.mrf.mxu0
        %v1017 = vadd.f32 %v887, %v1016
        %v1018 = vpop.f32.mrf.mxu0
        %v1019 = vadd.f32 %v887, %v1018
        %1020 = vmatmul.bf16.gmra.mxu0 %v852
        %v1021 = vpop.f32.mrf.mxu0
        %v1022 = vadd.f32 %v887, %v1021
        %v1023 = vpop.f32.mrf.mxu0
        %v1024 = vadd.f32 %v887, %v1023
        %1025 = vmatmul.bf16.gmra.mxu0 %v853
        %v1026 = vpop.f32.mrf.mxu0
        %v1027 = vadd.f32 %v887, %v1026
        %v1028 = vpop.f32.mrf.mxu0
        %v1029 = vadd.f32 %v887, %v1028
        %1030 = vmatmul.bf16.gmra.mxu0 %v854
        %v1031 = vpop.f32.mrf.mxu0
        %v1032 = vadd.f32 %v887, %v1031
        %v1033 = vpop.f32.mrf.mxu0
        %v1034 = vadd.f32 %v887, %v1033
        %1035 = vmatmul.bf16.gmra.mxu0 %v855
        %v1036 = vpop.f32.mrf.mxu0
        %v1037 = vadd.f32 %v887, %v1036
        %v1038 = vpop.f32.mrf.mxu0
        %v1039 = vadd.f32 %v887, %v1038
        %1040 = vmatmul.bf16.gmra.mxu0 %v856
        %v1041 = vpop.f32.mrf.mxu0
        %v1042 = vadd.f32 %v887, %v1041
        %v1043 = vpop.f32.mrf.mxu0
        %v1044 = vadd.f32 %v887, %v1043
        %1045 = vmatmul.bf16.gmra.mxu0 %v857
        %v1046 = vpop.f32.mrf.mxu0
        %v1047 = vadd.f32 %v887, %v1046
        %v1048 = vpop.f32.mrf.mxu0
        %v1049 = vadd.f32 %v887, %v1048
        %1050 = vmatmul.bf16.gmra.mxu0 %v858
        %v1051 = vpop.f32.mrf.mxu0
        %v1052 = vadd.f32 %v887, %v1051
        %v1053 = vpop.f32.mrf.mxu0
        %v1054 = vadd.f32 %v887, %v1053
        %1055 = vmatmul.bf16.gmra.mxu0 %v859
        %v1056 = vpop.f32.mrf.mxu0
        %v1057 = vadd.f32 %v887, %v1056
        %v1058 = vpop.f32.mrf.mxu0
        %v1059 = vadd.f32 %v887, %v1058
        %1060 = vmatmul.bf16.gmra.mxu0 %v860
        %v1061 = vpop.f32.mrf.mxu0
        %v1062 = vadd.f32 %v887, %v1061
        %v1063 = vpop.f32.mrf.mxu0
        %v1064 = vadd.f32 %v887, %v1063
        %1065 = vmatmul.bf16.gmra.mxu0 %v861
        %v1066 = vpop.f32.mrf.mxu0
        %v1067 = vadd.f32 %v887, %v1066
        %v1068 = vpop.f32.mrf.mxu0
        %v1069 = vadd.f32 %v887, %v1068
        %1070 = vmatmul.bf16.gmra.mxu0 %v862
        %v1071 = vpop.f32.mrf.mxu0
        %v1072 = vadd.f32 %v887, %v1071
        %v1073 = vpop.f32.mrf.mxu0
        %v1074 = vadd.f32 %v887, %v1073
        %1075 = vmatmul.bf16.gmra.mxu0 %v863
        %v1076 = vpop.f32.mrf.mxu0
        %v1077 = vadd.f32 %v887, %v1076
        %v1078 = vpop.f32.mrf.mxu0
        %v1079 = vadd.f32 %v887, %v1078
        %1080 = vmatmul.bf16.gmra.mxu0 %v864
        %v1081 = vpop.f32.mrf.mxu0
        %v1082 = vadd.f32 %v887, %v1081
        %v1083 = vpop.f32.mrf.mxu0
        %v1084 = vadd.f32 %v887, %v1083
        %1085 = vmatmul.bf16.gmra.mxu0 %v865
        %v1086 = vpop.f32.mrf.mxu0
        %v1087 = vadd.f32 %v887, %v1086
        %v1088 = vpop.f32.mrf.mxu0
        %v1089 = vadd.f32 %v887, %v1088
        %1090 = vmatmul.bf16.gmra.mxu0 %v866
        %v1091 = vpop.f32.mrf.mxu0
        %v1092 = vadd.f32 %v887, %v1091
        %v1093 = vpop.f32.mrf.mxu0
        %v1094 = vadd.f32 %v887, %v1093
        %1095 = vmatmul.bf16.gmra.mxu0 %v867
        %v1096 = vpop.f32.mrf.mxu0
        %v1097 = vadd.f32 %v887, %v1096
        %v1098 = vpop.f32.mrf.mxu0
        %v1099 = vadd.f32 %v887, %v1098
        %1100 = vmatmul.bf16.gmra.mxu0 %v868
        %v1101 = vpop.f32.mrf.mxu0
        %v1102 = vadd.f32 %v887, %v1101
        %v1103 = vpop.f32.mrf.mxu0
        %v1104 = vadd.f32 %v887, %v1103
        %1105 = vdwg.mxu0
        %v1106 = vpack.c.bf16 %v947, %v947
        %v1107 = vpack.c.bf16 %v949, %v949
        %v1108 = vpack.c.bf16 %v952, %v952
        %v1109 = vpack.c.bf16 %v954, %v954
        %v1110 = vpack.c.bf16 %v957, %v957
        %v1111 = vpack.c.bf16 %v959, %v959
        %v1112 = vpack.c.bf16 %v962, %v962
        %v1113 = vpack.c.bf16 %v964, %v964
        %v1114 = vpack.c.bf16 %v967, %v967
        %v1115 = vpack.c.bf16 %v969, %v969
        %v1116 = vpack.c.bf16 %v972, %v972
        %v1117 = vpack.c.bf16 %v974, %v974
        %v1118 = vpack.c.bf16 %v977, %v977
        %v1119 = vpack.c.bf16 %v979, %v979
        %v1120 = vpack.c.bf16 %v982, %v982
        %v1121 = vpack.c.bf16 %v984, %v984
        %v1122 = vpack.c.bf16 %v987, %v987
        %v1123 = vpack.c.bf16 %v989, %v989
        %v1124 = vpack.c.bf16 %v992, %v992
        %v1125 = vpack.c.bf16 %v994, %v994
        %v1126 = vpack.c.bf16 %v997, %v997
        %v1127 = vpack.c.bf16 %v999, %v999
        %v1128 = vpack.c.bf16 %v1002, %v1002
        %v1129 = vpack.c.bf16 %v1004, %v1004
        %v1130 = vpack.c.bf16 %v1007, %v1007
        %v1131 = vpack.c.bf16 %v1009, %v1009
        %v1132 = vpack.c.bf16 %v1012, %v1012
        %v1133 = vpack.c.bf16 %v1014, %v1014
        %v1134 = vpack.c.bf16 %v1017, %v1017
        %v1135 = vpack.c.bf16 %v1019, %v1019
        %v1136 = vpack.c.bf16 %v1022, %v1022
        %v1137 = vpack.c.bf16 %v1024, %v1024
        %v1138 = vpack.c.bf16 %v1027, %v1027
        %v1139 = vpack.c.bf16 %v1029, %v1029
        %v1140 = vpack.c.bf16 %v1032, %v1032
        %v1141 = vpack.c.bf16 %v1034, %v1034
        %v1142 = vpack.c.bf16 %v1037, %v1037
        %v1143 = vpack.c.bf16 %v1039, %v1039
        %v1144 = vpack.c.bf16 %v1042, %v1042
        %v1145 = vpack.c.bf16 %v1044, %v1044
        %v1146 = vpack.c.bf16 %v1047, %v1047
        %v1147 = vpack.c.bf16 %v1049, %v1049
        %v1148 = vpack.c.bf16 %v1052, %v1052
        %v1149 = vpack.c.bf16 %v1054, %v1054
        %v1150 = vpack.c.bf16 %v1057, %v1057
        %v1151 = vpack.c.bf16 %v1059, %v1059
        %v1152 = vpack.c.bf16 %v1062, %v1062
        %v1153 = vpack.c.bf16 %v1064, %v1064
        %v1154 = vpack.c.bf16 %v1067, %v1067
        %v1155 = vpack.c.bf16 %v1069, %v1069
        %v1156 = vpack.c.bf16 %v1072, %v1072
        %v1157 = vpack.c.bf16 %v1074, %v1074
        %v1158 = vpack.c.bf16 %v1077, %v1077
        %v1159 = vpack.c.bf16 %v1079, %v1079
        %v1160 = vpack.c.bf16 %v1082, %v1082
        %v1161 = vpack.c.bf16 %v1084, %v1084
        %v1162 = vpack.c.bf16 %v1087, %v1087
        %v1163 = vpack.c.bf16 %v1089, %v1089
        %v1164 = vpack.c.bf16 %v1092, %v1092
        %v1165 = vpack.c.bf16 %v1094, %v1094
        %v1166 = vpack.c.bf16 %v1097, %v1097
        %v1167 = vpack.c.bf16 %v1099, %v1099
        %v1168 = vpack.c.bf16 %v1102, %v1102
        %v1169 = vpack.c.bf16 %v1104, %v1104
        %1170 = vst [vmem:[%s277] sm:$0xf] %v1106
        %1171 = vst [vmem:[%s277 + $0x4] sm:$0xf] %v1107
        %1172 = vst [vmem:[%s277 + $0x8] sm:$0xf] %v1108
        %1173 = vst [vmem:[%s277 + $0xc] sm:$0xf] %v1109
        %1174 = vst [vmem:[%s277 + $0x10] sm:$0xf] %v1110
        %1175 = vst [vmem:[%s277 + $0x14] sm:$0xf] %v1111
        %1176 = vst [vmem:[%s277 + $0x18] sm:$0xf] %v1112
        %1177 = vst [vmem:[%s277 + $0x1c] sm:$0xf] %v1113
        %1178 = vst [vmem:[%s277 + $0x20] sm:$0xf] %v1114
        %1179 = vst [vmem:[%s277 + $0x24] sm:$0xf] %v1115
        %1180 = vst [vmem:[%s277 + $0x28] sm:$0xf] %v1116
        %1181 = vst [vmem:[%s277 + $0x2c] sm:$0xf] %v1117
        %1182 = vst [vmem:[%s277 + $0x30] sm:$0xf] %v1118
        %1183 = vst [vmem:[%s277 + $0x34] sm:$0xf] %v1119
        %1184 = vst [vmem:[%s277 + $0x38] sm:$0xf] %v1120
        %1185 = vst [vmem:[%s277 + $0x3c] sm:$0xf] %v1121
        %1186 = vst [vmem:[%s277 + $0x40] sm:$0xf] %v1122
        %1187 = vst [vmem:[%s277 + $0x44] sm:$0xf] %v1123
        %1188 = vst [vmem:[%s277 + $0x48] sm:$0xf] %v1124
        %1189 = vst [vmem:[%s277 + $0x4c] sm:$0xf] %v1125
        %1190 = vst [vmem:[%s277 + $0x50] sm:$0xf] %v1126
        %1191 = vst [vmem:[%s277 + $0x54] sm:$0xf] %v1127
        %1192 = vst [vmem:[%s277 + $0x58] sm:$0xf] %v1128
        %1193 = vst [vmem:[%s277 + $0x5c] sm:$0xf] %v1129
        %1194 = vst [vmem:[%s277 + $0x60] sm:$0xf] %v1130
        %1195 = vst [vmem:[%s277 + $0x64] sm:$0xf] %v1131
        %1196 = vst [vmem:[%s277 + $0x68] sm:$0xf] %v1132
        %1197 = vst [vmem:[%s277 + $0x6c] sm:$0xf] %v1133
        %1198 = vst [vmem:[%s277 + $0x70] sm:$0xf] %v1134
        %1199 = vst [vmem:[%s277 + $0x74] sm:$0xf] %v1135
        %1200 = vst [vmem:[%s277 + $0x78] sm:$0xf] %v1136
        %1201 = vst [vmem:[%s277 + $0x7c] sm:$0xf] %v1137
        %1202 = vst [vmem:[%s277 + $0x80] sm:$0xf] %v1138
        %1203 = vst [vmem:[%s277 + $0x84] sm:$0xf] %v1139
        %1204 = vst [vmem:[%s277 + $0x88] sm:$0xf] %v1140
        %1205 = vst [vmem:[%s277 + $0x8c] sm:$0xf] %v1141
        %1206 = vst [vmem:[%s277 + $0x90] sm:$0xf] %v1142
        %1207 = vst [vmem:[%s277 + $0x94] sm:$0xf] %v1143
        %1208 = vst [vmem:[%s277 + $0x98] sm:$0xf] %v1144
        %1209 = vst [vmem:[%s277 + $0x9c] sm:$0xf] %v1145
        %1210 = vst [vmem:[%s277 + $0xa0] sm:$0xf] %v1146
        %1211 = vst [vmem:[%s277 + $0xa4] sm:$0xf] %v1147
        %1212 = vst [vmem:[%s277 + $0xa8] sm:$0xf] %v1148
        %1213 = vst [vmem:[%s277 + $0xac] sm:$0xf] %v1149
        %1214 = vst [vmem:[%s277 + $0xb0] sm:$0xf] %v1150
        %1215 = vst [vmem:[%s277 + $0xb4] sm:$0xf] %v1151
        %1216 = vst [vmem:[%s277 + $0xb8] sm:$0xf] %v1152
        %1217 = vst [vmem:[%s277 + $0xbc] sm:$0xf] %v1153
        %1218 = vst [vmem:[%s277 + $0xc0] sm:$0xf] %v1154
        %1219 = vst [vmem:[%s277 + $0xc4] sm:$0xf] %v1155
        %1220 = vst [vmem:[%s277 + $0xc8] sm:$0xf] %v1156
        %1221 = vst [vmem:[%s277 + $0xcc] sm:$0xf] %v1157
        %1222 = vst [vmem:[%s277 + $0xd0] sm:$0xf] %v1158
        %1223 = vst [vmem:[%s277 + $0xd4] sm:$0xf] %v1159
        %1224 = vst [vmem:[%s277 + $0xd8] sm:$0xf] %v1160
        %1225 = vst [vmem:[%s277 + $0xdc] sm:$0xf] %v1161
        %1226 = vst [vmem:[%s277 + $0xe0] sm:$0xf] %v1162
        %1227 = vst [vmem:[%s277 + $0xe4] sm:$0xf] %v1163
        %1228 = vst [vmem:[%s277 + $0xe8] sm:$0xf] %v1164
        %1229 = vst [vmem:[%s277 + $0xec] sm:$0xf] %v1165
        %1230 = vst [vmem:[%s277 + $0xf0] sm:$0xf] %v1166
        %1231 = vst [vmem:[%s277 + $0xf4] sm:$0xf] %v1167
        %1232 = vst [vmem:[%s277 + $0xf8] sm:$0xf] %v1168
        %1233 = vst [vmem:[%s277 + $0xfc] sm:$0xf] %v1169
        %s1234 = sand.u32 %s141, 1
        %s1235 = scalar_lea.sflag [#allocation4], %s1234
        %s1236 = sand.u32 %s141, 1
        %s1237 = smul.addr %s1236, 256
        %s1238 = scalar_lea.vmem [#allocation8], %s1237
        // Predicated region
        $region53: #{mlp_forward_pallas.1} parent=39 // pred_check
          %p1239 = pneg %p151
        $region54: #{mlp_forward_pallas.1} parent=39 // pred_check_branch
          %1241 = sbr.rel (%p1239) target = $region56
        $region55: #{mlp_forward_pallas.1} parent=39 // pred_region
          %s1242 = smul.u32 64, %s23
          %1244 = vsyncadd %s1235, 0
          %s1245 = smul.addr %s1242, 4
          %s1246 = scalar_lea.hbm %s5, %s1245
          %s1247 = sshll.u32 %s1238, 4
          %s1248 = int_to_ptr.vmem [resolvable:$true] %s1247
          %s1249 = sshll.u32 %s1246, 4
          %s1250 = int_to_ptr.hbm [resolvable:$true] %s1249
          %1255 = dma.vmem_to_hbm [thread:$0]  %s1248, 4096, %s1250, %s1235, 64, 64, 4
        $region56: #{mlp_forward_pallas.1} parent=39 // pred_fallthru
          _
      $region40: #{mlp_forward_pallas.1} parent=5 // pred_fallthru
        _
      %p1256 = scmp.le.s32.totalorder 2, %s18
      // Predicated region
      $region57: #{mlp_forward_pallas.1} parent=5 // pred_check
        %p1257 = pneg %p1256
      $region58: #{mlp_forward_pallas.1} parent=5 // pred_check_branch
        %1259 = sbr.rel (%p1257) target = $region60
      $region59: #{mlp_forward_pallas.1} parent=5 // pred_region
        %s1260 = ssub.s32 %s18, 2
        // Predicated region
        $region61: #{mlp_forward_pallas.1} parent=59 // pred_check
          %p1261 = pneg %p157
        $region62: #{mlp_forward_pallas.1} parent=59 // pred_check_branch
          %1263 = sbr.rel (%p1261) target = $region64
        $region63: #{mlp_forward_pallas.1} parent=59 // pred_region
          %s1264 = sand.u32 %s142, 1
          %s1265 = scalar_lea.sflag [#allocation4], %s1264
          %s1266 = sand.u32 %s142, 1
          %s1267 = smul.addr %s1266, 256
          %s1268 = scalar_lea.vmem [#allocation8], %s1267
          %1270 = dma.done %s1265, 4096
        $region64: #{mlp_forward_pallas.1} parent=59 // pred_fallthru
          _
      $region60: #{mlp_forward_pallas.1} parent=5 // pred_fallthru
        _
    $region6: #{mlp_forward_pallas.1} parent=1 // loop_footer
      %s22 = sadd.s32 1, %s18
    $region7: #{mlp_forward_pallas.1} parent=1 // loop_footer_branch
      %17 = sbr.rel target = $region3
    $region8: #{mlp_forward_pallas.1} parent=1 // loop_exit
      _
    %1271 = vsyncpa [#allocation3], 1
    %s1272 = scalar_lea.sflag [#allocation3], 1
    %1273 = vsyncpa %s1272, 1
    %1274 = vsyncpa [#allocation6], 1
    %1275 = vsyncpa [#allocation4], 1
    %s1276 = scalar_lea.sflag [#allocation4], 1
    %1277 = vsyncpa %s1276, 1

</llo_original>
